<compile_context>
chip_gen: v6e
topology: v6e:2x2x1
jax: 0.10.0
libtpu: 0.0.40
codegen_flags: <defaults>
</compile_context>

<pallas_src>
import functools

import numpy as np
import jax
import jax.numpy as jnp
from jax.experimental import pallas as pl
from jax.experimental.pallas import tpu as pltpu


def _se_kernel(x_ref, w1_ref, w2_ref, o_ref, *, inv_hw):
    """One grid step == one batch element.

    x_ref : (1, HW, C)  activations, C on the lane axis (lane-dense)
    w1_ref: (C, Cr)     fc1 weight, pre-transposed to (in, out)
    w2_ref: (Cr, C)     fc2 weight, pre-transposed to (in, out)
    o_ref : (1, HW, C)
    """
    f32 = jnp.float32
    x = x_ref[0]                                              # (HW, C)

    # ---- squeeze: global average pool over all spatial positions ----------
    y = jnp.sum(x, axis=0, keepdims=True) * f32(inv_hw)       # (1, C)

    # ---- excitation: Linear -> ReLU -> Linear -> Sigmoid (no biases) ------
    h = jnp.dot(y, w1_ref[...], preferred_element_type=f32)   # (1, Cr)
    h = jnp.maximum(h, f32(0.0))
    z = jnp.dot(h, w2_ref[...], preferred_element_type=f32)   # (1, C)
    s = f32(1.0) / (f32(1.0) + jnp.exp(-z))                   # sigmoid gate

    # ---- scale: broadcast per-channel gate over the spatial axis ----------
    o_ref[0] = x * s


def se_layer_pallas(x_nchw, w_fc1, w_fc2):
    """SELayer forward. x_nchw: (B, C, H, W) f32. Weights in torch layout:
    w_fc1: (C//r, C), w_fc2: (C, C//r). Returns (B, C, H, W)."""
    B, C, H, W = x_nchw.shape
    Cr = w_fc1.shape[0]
    assert w_fc1.shape == (Cr, C) and w_fc2.shape == (C, Cr)
    HW = H * W

    # NCHW -> (B, H*W, C): channels land on the lane axis (lane-dense stores).
    x_bsc = jnp.transpose(x_nchw, (0, 2, 3, 1)).reshape(B, HW, C)
    w1 = jnp.transpose(w_fc1)   # (C, Cr)   y @ W1.T == y @ w1
    w2 = jnp.transpose(w_fc2)   # (Cr, C)

    kernel = functools.partial(_se_kernel, inv_hw=1.0 / float(HW))

    # Advisory cost hint (fc matmuls + elementwise scale; 2x activation traffic).
    flops = 2 * B * (C * Cr + Cr * C) + 2 * B * HW * C
    bytes_accessed = 4 * (2 * B * HW * C + 2 * C * Cr)
    cost = pl.CostEstimate(flops=int(flops), transcendentals=int(B * C),
                           bytes_accessed=int(bytes_accessed))

    # TODO(synk): for very large H*W*C the per-image block should be split into
    # a two-pass (reduce, then scale) spatially-tiled grid to bound VMEM.
    out = pl.pallas_call(
        kernel,
        out_shape=jax.ShapeDtypeStruct((B, HW, C), jnp.float32),
        grid=(B,),
        in_specs=[
            pl.BlockSpec((1, HW, C), lambda b: (b, 0, 0)),
            pl.BlockSpec((C, Cr), lambda b: (0, 0)),
            pl.BlockSpec((Cr, C), lambda b: (0, 0)),
        ],
        out_specs=pl.BlockSpec((1, HW, C), lambda b: (b, 0, 0)),
        compiler_params=pltpu.CompilerParams(
            dimension_semantics=("parallel",)),
        cost_estimate=cost,
    )(x_bsc, w1, w2)

    # (B, H*W, C) -> NCHW
    return jnp.transpose(out.reshape(B, H, W, C), (0, 3, 1, 2))


def se_layer_reference(x, w_fc1, w_fc2):
    """Pure-JAX reference (torch semantics) for correctness checking."""
    y = jnp.mean(x, axis=(2, 3))                       # (B, C)
    h = jnp.maximum(y @ w_fc1.T, 0.0)                  # (B, C//r)
    s = jax.nn.sigmoid(h @ w_fc2.T)                    # (B, C)
    return x * s[:, :, None, None]


if __name__ == "__main__":
    # SELayer(channel=128, reduction=16): hidden = 8.
    B, C, H, W = 2, 128, 16, 16
    reduction = 16
    Cr = C // reduction

    key = jax.random.PRNGKey(0)
    kx, k1, k2 = jax.random.split(key, 3)
    x = jax.random.normal(kx, (B, C, H, W), jnp.float32)
    w_fc1 = (1.0 / np.sqrt(C)) * jax.random.normal(k1, (Cr, C), jnp.float32)
    w_fc2 = (1.0 / np.sqrt(Cr)) * jax.random.normal(k2, (C, Cr), jnp.float32)

    out = jax.block_until_ready(se_layer_pallas(x, w_fc1, w_fc2))
    ref = jax.block_until_ready(se_layer_reference(x, w_fc1, w_fc2))

    assert out.shape == (B, C, H, W)
    np.testing.assert_allclose(np.asarray(out), np.asarray(ref),
                               rtol=2e-3, atol=2e-3)

    print("KERNEL_OK")
</pallas_src>

<mosaic_0001>
module attributes {stable_mosaic.version = 11 : i64} {
  func.func @_se_kernel(%arg0: i32, %arg1: memref<1x256x128xf32, #tpu.memory_space<vmem>>, %arg2: memref<128x8xf32, #tpu.memory_space<vmem>>, %arg3: memref<8x128xf32, #tpu.memory_space<vmem>>, %arg4: memref<1x256x128xf32, #tpu.memory_space<vmem>>) attributes {dimension_semantics = [#tpu.dimension_semantics<parallel>], iteration_bounds = array<i64: 2>, scalar_prefetch = 0 : i64, scratch_operands = 0 : i64, tpu.core_type = #tpu.core_type<tc>, window_params = [{transform_indices = @transform_0, window_bounds = array<i64: 1, 256, 128>}, {pipeline_mode = #tpu.pipeline_mode<synchronous>, transform_indices = @transform_1, window_bounds = array<i64: 128, 8>}, {pipeline_mode = #tpu.pipeline_mode<synchronous>, transform_indices = @transform_2, window_bounds = array<i64: 8, 128>}, {transform_indices = @transform_3, window_bounds = array<i64: 1, 256, 128>}]} {
    %c0 = arith.constant 0 : index
    %c0_0 = arith.constant 0 : index
    %c0_1 = arith.constant 0 : index
    %0 = vector.load %arg1[%c0, %c0_0, %c0_1] : memref<1x256x128xf32, #tpu.memory_space<vmem>>, vector<1x256x128xf32>
    %1 = vector.shape_cast %0 : vector<1x256x128xf32> to vector<256x128xf32>
    %cst = arith.constant dense<0.000000e+00> : vector<128xf32>
    %2 = vector.multi_reduction <add>, %1, %cst [0] : vector<256x128xf32> to vector<128xf32>
    %3 = vector.shape_cast %2 : vector<128xf32> to vector<1x128xf32>
    %cst_2 = arith.constant 3.906250e-03 : f32
    %4 = vector.broadcast %cst_2 : f32 to vector<1x128xf32>
    %5 = arith.mulf %3, %4 : vector<1x128xf32>
    %c0_3 = arith.constant 0 : index
    %c0_4 = arith.constant 0 : index
    %6 = vector.load %arg2[%c0_3, %c0_4] : memref<128x8xf32, #tpu.memory_space<vmem>>, vector<128x8xf32>
    %cst_5 = arith.constant dense<0.000000e+00> : vector<1x8xf32>
    %7 = tpu.matmul %5, %6, %cst_5 {dimension_numbers = #tpu.dot_dimension_numbers<[1], [0], [0], [1], [0, 0, 1, 1], [], []>} : vector<1x128xf32>, vector<128x8xf32>, vector<1x8xf32> -> vector<1x8xf32>
    %cst_6 = arith.constant 0.000000e+00 : f32
    %8 = vector.broadcast %cst_6 : f32 to vector<1x8xf32>
    %9 = arith.maximumf %7, %8 : vector<1x8xf32>
    %c0_7 = arith.constant 0 : index
    %c0_8 = arith.constant 0 : index
    %10 = vector.load %arg3[%c0_7, %c0_8] : memref<8x128xf32, #tpu.memory_space<vmem>>, vector<8x128xf32>
    %cst_9 = arith.constant dense<0.000000e+00> : vector<1x128xf32>
    %11 = tpu.matmul %9, %10, %cst_9 {dimension_numbers = #tpu.dot_dimension_numbers<[1], [0], [0], [1], [0, 0, 1, 1], [], []>} : vector<1x8xf32>, vector<8x128xf32>, vector<1x128xf32> -> vector<1x128xf32>
    %cst_10 = arith.constant 0.000000e+00 : f32
    %12 = vector.broadcast %cst_10 : f32 to vector<1x128xf32>
    %13 = arith.subf %12, %11 : vector<1x128xf32>
    %14 = math.exp %13 : vector<1x128xf32>
    %cst_11 = arith.constant 1.000000e+00 : f32
    %15 = vector.broadcast %cst_11 : f32 to vector<1x128xf32>
    %16 = arith.addf %15, %14 : vector<1x128xf32>
    %cst_12 = arith.constant 1.000000e+00 : f32
    %17 = vector.broadcast %cst_12 : f32 to vector<1x128xf32>
    %18 = arith.divf %17, %16 : vector<1x128xf32>
    %19 = vector.broadcast %18 : vector<1x128xf32> to vector<256x128xf32>
    %20 = arith.mulf %1, %19 : vector<256x128xf32>
    %c0_13 = arith.constant 0 : index
    %c0_14 = arith.constant 0 : index
    %c0_15 = arith.constant 0 : index
    %21 = vector.load %arg4[%c0_13, %c0_14, %c0_15] : memref<1x256x128xf32, #tpu.memory_space<vmem>>, vector<1x256x128xf32>
    %22 = vector.shape_cast %21 : vector<1x256x128xf32> to vector<256x128xf32>
    %23 = vector.shape_cast %20 : vector<256x128xf32> to vector<1x256x128xf32>
    tpu.vector_store %arg4[%c0_13, %c0_14, %c0_15], %23 {strides = array<i32>} : memref<1x256x128xf32, #tpu.memory_space<vmem>>, vector<1x256x128xf32>,
    return
  }
  func.func @transform_0(%arg0: i32) -> (i32, i32, i32) {
    %c0_i32 = arith.constant 0 : i32
    %c0_i32_0 = arith.constant 0 : i32
    %c0_i32_1 = arith.constant 0 : i32
    return %arg0, %c0_i32, %c0_i32_0 : i32, i32, i32
  }
  func.func @transform_1(%arg0: i32) -> (i32, i32) {
    %c0_i32 = arith.constant 0 : i32
    %c0_i32_0 = arith.constant 0 : i32
    %c0_i32_1 = arith.constant 0 : i32
    return %c0_i32, %c0_i32_0 : i32, i32
  }
  func.func @transform_2(%arg0: i32) -> (i32, i32) {
    %c0_i32 = arith.constant 0 : i32
    %c0_i32_0 = arith.constant 0 : i32
    %c0_i32_1 = arith.constant 0 : i32
    return %c0_i32, %c0_i32_0 : i32, i32
  }
  func.func @transform_3(%arg0: i32) -> (i32, i32, i32) {
    %c0_i32 = arith.constant 0 : i32
    %c0_i32_0 = arith.constant 0 : i32
    %c0_i32_1 = arith.constant 0 : i32
    return %arg0, %c0_i32, %c0_i32_0 : i32, i32, i32
  }
}

</mosaic_0001>

<llo_original>
// kernel: tpu_custom_call.1
$region0: #{tpu_custom_call.1}
  #allocation0 [shape = 'u32[]', space=smem, size = 0x4, offset = 0x4, fixed_abs, tag = 'smem constant byte address 0x4 - core index']
  #allocation1 [shape = 'u32[144,128]{1,0:T(1,128)}', space=vmem, size = 0x12000, scoped, tag = 'internal scratch']
  %s0 = inlined_call_operand.hbm [shape: f32[2,256,128], index: 0, kind: input, shape index: {}]
  %s1 = inlined_call_operand.vmem [shape: f32[128,8], index: 1, kind: input, shape index: {}]
  %s2 = inlined_call_operand.vmem [shape: f32[8,128], index: 2, kind: input, shape index: {}]
  %s3 = inlined_call_operand.hbm [shape: f32[2,256,128], index: 3, kind: output, shape index: {}]
  %s4 = sld [smem:[#allocation0]]
  $region49: #{tpu_custom_call.1} parent=0
    _
  %s6 = ssub.s32 1, %s4
  %s7 = scalar_select 0, %s6, %s4
  $region1: #{tpu_custom_call.1} parent=0
    #allocation2 [shape = 'u8[262144]{0}', space=vmem, size = 0x40000, scoped, tag = 'input window, operand 0']
    #allocation3 [shape = 's32[2]{0}', space=sflag, size = 0x8, scoped, tag = 'scoped memory for tpu_custom_call.1']
    #allocation4 [shape = 's32[2]{0}', space=sflag, size = 0x8, scoped, tag = 'scoped memory for tpu_custom_call.1']
    #allocation5 [shape = 'u8[262144]{0}', space=vmem, size = 0x40000, scoped, tag = 'output window, operand 0']
    %8 = vsyncpa [#allocation3], 0
    %s9 = scalar_lea.sflag [#allocation3], 1
    %10 = vsyncpa %s9, 0
    %11 = vsyncpa [#allocation4], 0
    %s12 = scalar_lea.sflag [#allocation4], 1
    %13 = vsyncpa %s12, 0
    loop: start=0, step=1, limit=4
    $region2: #{tpu_custom_call.1} parent=1 // loop_pre_header
      _
    $region3: #{tpu_custom_call.1} parent=1 // loop_header
      %s15 = sphi 0, %s19
      %p16 = scmp.ge.s32.totalorder %s15, 4
      %s25 = sphi 0, %s27
      %s28 = sphi 0, %s25
      %s29 = sphi 0, %s28
      %s45 = sphi 0, %s29
      %s49 = sphi 0, %s49
      %s51 = sphi 0, %s49
      %s52 = sphi 0, %s51
      %s66 = sphi 0, %s52
      %s70 = sphi 0, %s70
      %s72 = sphi 0, %s70
      %s73 = sphi 0, %s72
      %s87 = sphi 0, %s73
      %s93 = sphi 0, %s95
      %s96 = sphi 0, %s93
      %s97 = sphi 0, %s96
      %s113 = sphi 0, %s97
    $region4: #{tpu_custom_call.1} parent=1 // loop_header_branch
      %18 = sbr.rel (%p16) target = $region8
    $region5: #{tpu_custom_call.1} parent=1 // loop_body
      %s20 = ssub.s32 %s15, 1
      %s21 = ssub.s32 %s15, 2
      %s22 = sadd.s32 %s15, 1
      %s23 = ssub.s32 %s15, %s22
      %p24 = scmp.eq.s32.totalorder %s23, 0
      %s26 = sadd.s32 %s25, 1
      %s27 = scalar_select %p24, %s25, %s26
      %p30 = pneg %p24
      %p31 = scmp.eq.s32.totalorder %s15, 1
      %p32 = por %p30, %p31
      %p33 = scmp.ne.s32.totalorder %s25, %s28
      %p34 = scmp.eq.s32.totalorder %s15, 0
      %p35 = por %p33, %p34
      %p36 = scmp.ne.s32.totalorder %s25, %s28
      %p37 = scmp.eq.s32.totalorder %s20, 1
      %p38 = por %p36, %p37
      %p39 = scmp.ne.s32.totalorder %s28, %s29
      %p40 = scmp.eq.s32.totalorder %s20, 0
      %p41 = por %p39, %p40
      %p42 = scmp.ne.s32.totalorder %s28, %s29
      %p43 = scmp.eq.s32.totalorder %s21, 1
      %p44 = por %p42, %p43
      %p46 = scmp.ne.s32.totalorder %s29, %s45
      %p47 = scmp.eq.s32.totalorder %s21, 0
      %p48 = por %p46, %p47
      %s50 = sadd.s32 %s49, 1
      %p53 = scmp.eq.s32.totalorder %s15, 1
      %p54 = scmp.ne.s32.totalorder %s49, %s51
      %p55 = scmp.eq.s32.totalorder %s15, 0
      %p56 = por %p54, %p55
      %p57 = scmp.ne.s32.totalorder %s49, %s51
      %p58 = scmp.eq.s32.totalorder %s20, 1
      %p59 = por %p57, %p58
      %p60 = scmp.ne.s32.totalorder %s51, %s52
      %p61 = scmp.eq.s32.totalorder %s20, 0
      %p62 = por %p60, %p61
      %p63 = scmp.ne.s32.totalorder %s51, %s52
      %p64 = scmp.eq.s32.totalorder %s21, 1
      %p65 = por %p63, %p64
      %p67 = scmp.ne.s32.totalorder %s52, %s66
      %p68 = scmp.eq.s32.totalorder %s21, 0
      %p69 = por %p67, %p68
      %s71 = sadd.s32 %s70, 1
      %p74 = scmp.eq.s32.totalorder %s15, 1
      %p75 = scmp.ne.s32.totalorder %s70, %s72
      %p76 = scmp.eq.s32.totalorder %s15, 0
      %p77 = por %p75, %p76
      %p78 = scmp.ne.s32.totalorder %s70, %s72
      %p79 = scmp.eq.s32.totalorder %s20, 1
      %p80 = por %p78, %p79
      %p81 = scmp.ne.s32.totalorder %s72, %s73
      %p82 = scmp.eq.s32.totalorder %s20, 0
      %p83 = por %p81, %p82
      %p84 = scmp.ne.s32.totalorder %s72, %s73
      %p85 = scmp.eq.s32.totalorder %s21, 1
      %p86 = por %p84, %p85
      %p88 = scmp.ne.s32.totalorder %s73, %s87
      %p89 = scmp.eq.s32.totalorder %s21, 0
      %p90 = por %p88, %p89
      %s91 = ssub.s32 %s15, %s22
      %p92 = scmp.eq.s32.totalorder %s91, 0
      %s94 = sadd.s32 %s93, 1
      %s95 = scalar_select %p92, %s93, %s94
      %p98 = pneg %p92
      %p99 = scmp.eq.s32.totalorder %s15, 1
      %p100 = por %p98, %p99
      %p101 = scmp.ne.s32.totalorder %s93, %s96
      %p102 = scmp.eq.s32.totalorder %s15, 0
      %p103 = por %p101, %p102
      %p104 = scmp.ne.s32.totalorder %s93, %s96
      %p105 = scmp.eq.s32.totalorder %s20, 1
      %p106 = por %p104, %p105
      %p107 = scmp.ne.s32.totalorder %s96, %s97
      %p108 = scmp.eq.s32.totalorder %s20, 0
      %p109 = por %p107, %p108
      %p110 = scmp.ne.s32.totalorder %s96, %s97
      %p111 = scmp.eq.s32.totalorder %s21, 1
      %p112 = por %p110, %p111
      %p114 = scmp.ne.s32.totalorder %s97, %s113
      %p115 = scmp.eq.s32.totalorder %s21, 0
      %p116 = por %p114, %p115
      %p117 = scmp.le.s32.totalorder 1, %s15
      %p118 = scmp.lt.s32.totalorder %s15, 3
      %p119 = pnand %p117, %p118
      %p120 = pneg %p119
      // Predicated region
      $region9: #{tpu_custom_call.1} parent=5 // pred_check
        _
      $region10: #{tpu_custom_call.1} parent=5 // pred_check_branch
        %122 = sbr.rel (%p119) target = $region12
      $region11: #{tpu_custom_call.1} parent=5 // pred_region
        %s123 = ssub.s32 %s15, 1
        // Predicated region
        $region13: #{tpu_custom_call.1} parent=11 // pred_check
          %p124 = pneg %p62
        $region14: #{tpu_custom_call.1} parent=11 // pred_check_branch
          %126 = sbr.rel (%p124) target = $region16
        $region15: #{tpu_custom_call.1} parent=11 // pred_region
          _
        $region16: #{tpu_custom_call.1} parent=11 // pred_fallthru
          _
        // Predicated region
        $region17: #{tpu_custom_call.1} parent=11 // pred_check
          %p127 = pneg %p83
        $region18: #{tpu_custom_call.1} parent=11 // pred_check_branch
          %129 = sbr.rel (%p127) target = $region20
        $region19: #{tpu_custom_call.1} parent=11 // pred_region
          _
        $region20: #{tpu_custom_call.1} parent=11 // pred_fallthru
          _
      $region12: #{tpu_custom_call.1} parent=5 // pred_fallthru
        _
      %p130 = scmp.lt.s32.totalorder %s15, 2
      // Predicated region
      $region21: #{tpu_custom_call.1} parent=5 // pred_check
        %p131 = pneg %p130
      $region22: #{tpu_custom_call.1} parent=5 // pred_check_branch
        %133 = sbr.rel (%p131) target = $region24
      $region23: #{tpu_custom_call.1} parent=5 // pred_region
        // Predicated region
        $region25: #{tpu_custom_call.1} parent=23 // pred_check
          %p134 = pneg %p35
        $region26: #{tpu_custom_call.1} parent=23 // pred_check_branch
          %136 = sbr.rel (%p134) target = $region28
        $region27: #{tpu_custom_call.1} parent=23 // pred_region
          %s137 = sand.u32 %s25, 1
          %s138 = scalar_lea.sflag [#allocation3], %s137
          %s139 = sand.u32 %s25, 1
          %s140 = smul.addr %s139, 256
          %s141 = scalar_lea.vmem [#allocation2], %s140
          %s143 = ssub.s32 4096, 4096
          %144 = vsyncadd %s138, %s143
          %s145 = smul.addr %s15, 32
          %s146 = smul.addr %s145, 128
          %s147 = scalar_lea.hbm %s0, %s146
          %s148 = sshll.u32 %s141, 4
          %s149 = int_to_ptr.vmem [resolvable:$true] %s148
          %154 = dma.hbm_to_vmem [thread:$0]  %s147, 4096, %s149, %s138, 128, 128, 8
        $region28: #{tpu_custom_call.1} parent=23 // pred_fallthru
          _
      $region24: #{tpu_custom_call.1} parent=5 // pred_fallthru
        _
      %p155 = scmp.le.s32.totalorder 1, %s15
      %p156 = scmp.lt.s32.totalorder %s15, 3
      %p157 = pnand %p155, %p156
      %p158 = pneg %p157
      // Predicated region
      $region29: #{tpu_custom_call.1} parent=5 // pred_check
        _
      $region30: #{tpu_custom_call.1} parent=5 // pred_check_branch
        %160 = sbr.rel (%p157) target = $region32
      $region31: #{tpu_custom_call.1} parent=5 // pred_region
        %s161 = ssub.s32 %s15, 1
        %s162 = sand.u32 %s28, 1
        %s163 = scalar_lea.sflag [#allocation3], %s162
        %s164 = sand.u32 %s28, 1
        %s165 = smul.addr %s164, 256
        %s166 = scalar_lea.vmem [#allocation2], %s165
        // Predicated region
        $region33: #{tpu_custom_call.1} parent=31 // pred_check
          %p167 = pneg %p41
        $region34: #{tpu_custom_call.1} parent=31 // pred_check_branch
          %169 = sbr.rel (%p167) target = $region36
        $region35: #{tpu_custom_call.1} parent=31 // pred_region
          %170 = dma.done %s163, 4096
        $region36: #{tpu_custom_call.1} parent=31 // pred_fallthru
          _
        %s171 = sand.u32 %s28, 1
        %s172 = scalar_lea.sflag [#allocation3], %s171
        %s173 = sand.u32 %s28, 1
        %s174 = smul.addr %s173, 256
        %s175 = scalar_lea.vmem [#allocation2], %s174
        %p176 = pneg %p41
        %p177 = pneg %p38
        %p178 = pneg %p62
        %p179 = pneg %p59
        %p180 = pneg %p83
        %p181 = pneg %p80
        %p182 = pneg %p109
        %p183 = pneg %p106
        %s184 = sand.u32 %s96, 1
        %s185 = scalar_lea.sflag [#allocation4], %s184
        %s186 = sand.u32 %s96, 1
        %s187 = smul.addr %s186, 256
        %s188 = scalar_lea.vmem [#allocation5], %s187
        %v189 = vld [vmem:[%s166] sm:$0xff]
        %v190 = vld [vmem:[%s166 + $0x8] sm:$0xff]
        %v191 = vld [vmem:[%s166 + $0x10] sm:$0xff]
        %v192 = vld [vmem:[%s166 + $0x18] sm:$0xff]
        %v193 = vld [vmem:[%s166 + $0x20] sm:$0xff]
        %v194 = vld [vmem:[%s166 + $0x28] sm:$0xff]
        %v195 = vld [vmem:[%s166 + $0x30] sm:$0xff]
        %v196 = vld [vmem:[%s166 + $0x38] sm:$0xff]
        %v197 = vld [vmem:[%s166 + $0x40] sm:$0xff]
        %v198 = vld [vmem:[%s166 + $0x48] sm:$0xff]
        %v199 = vld [vmem:[%s166 + $0x50] sm:$0xff]
        %v200 = vld [vmem:[%s166 + $0x58] sm:$0xff]
        %v201 = vld [vmem:[%s166 + $0x60] sm:$0xff]
        %v202 = vld [vmem:[%s166 + $0x68] sm:$0xff]
        %v203 = vld [vmem:[%s166 + $0x70] sm:$0xff]
        %v204 = vld [vmem:[%s166 + $0x78] sm:$0xff]
        %v205 = vld [vmem:[%s166 + $0x80] sm:$0xff]
        %v206 = vld [vmem:[%s166 + $0x88] sm:$0xff]
        %v207 = vld [vmem:[%s166 + $0x90] sm:$0xff]
        %v208 = vld [vmem:[%s166 + $0x98] sm:$0xff]
        %v209 = vld [vmem:[%s166 + $0xa0] sm:$0xff]
        %v210 = vld [vmem:[%s166 + $0xa8] sm:$0xff]
        %v211 = vld [vmem:[%s166 + $0xb0] sm:$0xff]
        %v212 = vld [vmem:[%s166 + $0xb8] sm:$0xff]
        %v213 = vld [vmem:[%s166 + $0xc0] sm:$0xff]
        %v214 = vld [vmem:[%s166 + $0xc8] sm:$0xff]
        %v215 = vld [vmem:[%s166 + $0xd0] sm:$0xff]
        %v216 = vld [vmem:[%s166 + $0xd8] sm:$0xff]
        %v217 = vld [vmem:[%s166 + $0xe0] sm:$0xff]
        %v218 = vld [vmem:[%s166 + $0xe8] sm:$0xff]
        %v219 = vld [vmem:[%s166 + $0xf0] sm:$0xff]
        %v220 = vld [vmem:[%s166 + $0xf8] sm:$0xff]
        %v221 = vadd.f32 %v189, %v190
        %v222 = vadd.f32 %v221, %v191
        %v223 = vadd.f32 %v222, %v192
        %v224 = vadd.f32 %v223, %v193
        %v225 = vadd.f32 %v224, %v194
        %v226 = vadd.f32 %v225, %v195
        %v227 = vadd.f32 %v226, %v196
        %v228 = vadd.f32 %v227, %v197
        %v229 = vadd.f32 %v228, %v198
        %v230 = vadd.f32 %v229, %v199
        %v231 = vadd.f32 %v230, %v200
        %v232 = vadd.f32 %v231, %v201
        %v233 = vadd.f32 %v232, %v202
        %v234 = vadd.f32 %v233, %v203
        %v235 = vadd.f32 %v234, %v204
        %v236 = vadd.f32 %v235, %v205
        %v237 = vadd.f32 %v236, %v206
        %v238 = vadd.f32 %v237, %v207
        %v239 = vadd.f32 %v238, %v208
        %v240 = vadd.f32 %v239, %v209
        %v241 = vadd.f32 %v240, %v210
        %v242 = vadd.f32 %v241, %v211
        %v243 = vadd.f32 %v242, %v212
        %v244 = vadd.f32 %v243, %v213
        %v245 = vadd.f32 %v244, %v214
        %v246 = vadd.f32 %v245, %v215
        %v247 = vadd.f32 %v246, %v216
        %v248 = vadd.f32 %v247, %v217
        %v249 = vadd.f32 %v248, %v218
        %v250 = vadd.f32 %v249, %v219
        %v251 = vadd.f32 %v250, %v220
        %v252 = vrot.slane %v251, 4
        %v253 = vadd.f32 %v251, %v252
        %v254 = vrot.slane %v253, 2
        %v255 = vadd.f32 %v253, %v254
        %v256 = vrot.slane %v255, 1
        %v257 = vadd.f32 %v255, %v256
        %v258 = vmul.f32 %v257, 0.00390625
        %v259 = vld [vmem:[%s1] sm:$0xff]
        %v260 = vld [vmem:[%s1 + $0x8] sm:$0xff]
        %v261 = vld [vmem:[%s1 + $0x10] sm:$0xff]
        %v262 = vld [vmem:[%s1 + $0x18] sm:$0xff]
        %v263 = vld [vmem:[%s1 + $0x20] sm:$0xff]
        %v264 = vld [vmem:[%s1 + $0x28] sm:$0xff]
        %v265 = vld [vmem:[%s1 + $0x30] sm:$0xff]
        %v266 = vld [vmem:[%s1 + $0x38] sm:$0xff]
        %v267 = vld [vmem:[%s1 + $0x40] sm:$0xff]
        %v268 = vld [vmem:[%s1 + $0x48] sm:$0xff]
        %v269 = vld [vmem:[%s1 + $0x50] sm:$0xff]
        %v270 = vld [vmem:[%s1 + $0x58] sm:$0xff]
        %v271 = vld [vmem:[%s1 + $0x60] sm:$0xff]
        %v272 = vld [vmem:[%s1 + $0x68] sm:$0xff]
        %v273 = vld [vmem:[%s1 + $0x70] sm:$0xff]
        %v274 = vld [vmem:[%s1 + $0x78] sm:$0xff]
        %275 = vmatprep.subr.mxu0 0.0
        %276 = vmatpush1.msra.mxu0 %v274
        %277 = vmatprep.subr.mxu0 0.0
        %278 = vmatpush1.msra.mxu0 %v273
        %279 = vmatprep.subr.mxu0 0.0
        %280 = vmatpush1.msra.mxu0 %v272
        %281 = vmatprep.subr.mxu0 0.0
        %282 = vmatpush1.msra.mxu0 %v271
        %283 = vmatprep.subr.mxu0 0.0
        %284 = vmatpush1.msra.mxu0 %v270
        %285 = vmatprep.subr.mxu0 0.0
        %286 = vmatpush1.msra.mxu0 %v269
        %287 = vmatprep.subr.mxu0 0.0
        %288 = vmatpush1.msra.mxu0 %v268
        %289 = vmatprep.subr.mxu0 0.0
        %290 = vmatpush1.msra.mxu0 %v267
        %291 = vmatprep.subr.mxu0 0.0
        %292 = vmatpush1.msra.mxu0 %v266
        %293 = vmatprep.subr.mxu0 0.0
        %294 = vmatpush1.msra.mxu0 %v265
        %295 = vmatprep.subr.mxu0 0.0
        %296 = vmatpush1.msra.mxu0 %v264
        %297 = vmatprep.subr.mxu0 0.0
        %298 = vmatpush1.msra.mxu0 %v263
        %299 = vmatprep.subr.mxu0 0.0
        %300 = vmatpush1.msra.mxu0 %v262
        %301 = vmatprep.subr.mxu0 0.0
        %302 = vmatpush1.msra.mxu0 %v261
        %303 = vmatprep.subr.mxu0 0.0
        %304 = vmatpush1.msra.mxu0 %v260
        %305 = vmatprep.subr.mxu0 0.0
        %306 = vmatpush1.msra.mxu0 %v259
        %307 = vmatprep.subr.mxu0 0.0
        %308 = vmatpush2.msra.mxu0 0.0
        %309 = vmatprep.subr.mxu0 0.0
        %310 = vmatpush2.msra.mxu0 0.0
        %311 = vmatprep.subr.mxu0 0.0
        %312 = vmatpush2.msra.mxu0 0.0
        %313 = vmatprep.subr.mxu0 0.0
        %314 = vmatpush2.msra.mxu0 0.0
        %315 = vmatprep.subr.mxu0 0.0
        %316 = vmatpush2.msra.mxu0 0.0
        %317 = vmatprep.subr.mxu0 0.0
        %318 = vmatpush2.msra.mxu0 0.0
        %319 = vmatprep.subr.mxu0 0.0
        %320 = vmatpush2.msra.mxu0 0.0
        %321 = vmatprep.subr.mxu0 0.0
        %322 = vmatpush2.msra.mxu0 0.0
        %323 = vmatprep.subr.mxu0 0.0
        %324 = vmatpush2.msra.mxu0 0.0
        %325 = vmatprep.subr.mxu0 0.0
        %326 = vmatpush2.msra.mxu0 0.0
        %327 = vmatprep.subr.mxu0 0.0
        %328 = vmatpush2.msra.mxu0 0.0
        %329 = vmatprep.subr.mxu0 0.0
        %330 = vmatpush2.msra.mxu0 0.0
        %331 = vmatprep.subr.mxu0 0.0
        %332 = vmatpush2.msra.mxu0 0.0
        %333 = vmatprep.subr.mxu0 0.0
        %334 = vmatpush2.msra.mxu0 0.0
        %335 = vmatprep.subr.mxu0 0.0
        %336 = vmatpush2.msra.mxu0 0.0
        %337 = vmatprep.subr.mxu0 0.0
        %338 = vmatpush2.msra.mxu0 0.0
        %339 = vmatprep.mubr.f32.mxu0 0.0
        %340 = vmatmul.mubr.f32.gmra.mxu0 %v258
        %v341 = vpop.f32.mrf.mxu0
        %v342 = vadd.f32 0.0, %v341
        %v343 = vpop.f32.mrf.mxu0
        %344 = vdwg.mxu0
        %v345 = vmax.f32 %v342, 0.0
        %v346 = vld [vmem:[%s2] sm:$0xff]
        %vm347 = vcmask 64512
        %v349 = vsel %vm347, %v345, 0
        %351 = vmatprep.subr.mxu0 0.0
        %352 = vmatpush1.msra.mxu0 0.0
        %353 = vmatprep.subr.mxu0 0.0
        %354 = vmatpush1.msra.mxu0 0.0
        %355 = vmatprep.subr.mxu0 0.0
        %356 = vmatpush1.msra.mxu0 0.0
        %357 = vmatprep.subr.mxu0 0.0
        %358 = vmatpush1.msra.mxu0 0.0
        %359 = vmatprep.subr.mxu0 0.0
        %360 = vmatpush1.msra.mxu0 0.0
        %361 = vmatprep.subr.mxu0 0.0
        %362 = vmatpush1.msra.mxu0 0.0
        %363 = vmatprep.subr.mxu0 0.0
        %364 = vmatpush1.msra.mxu0 0.0
        %365 = vmatprep.subr.mxu0 0.0
        %366 = vmatpush1.msra.mxu0 0.0
        %367 = vmatprep.subr.mxu0 0.0
        %368 = vmatpush1.msra.mxu0 0.0
        %369 = vmatprep.subr.mxu0 0.0
        %370 = vmatpush1.msra.mxu0 0.0
        %371 = vmatprep.subr.mxu0 0.0
        %372 = vmatpush1.msra.mxu0 0.0
        %373 = vmatprep.subr.mxu0 0.0
        %374 = vmatpush1.msra.mxu0 0.0
        %375 = vmatprep.subr.mxu0 0.0
        %376 = vmatpush1.msra.mxu0 0.0
        %377 = vmatprep.subr.mxu0 0.0
        %378 = vmatpush1.msra.mxu0 0.0
        %379 = vmatprep.subr.mxu0 0.0
        %380 = vmatpush1.msra.mxu0 0.0
        %381 = vmatprep.subr.mxu0 0.0
        %382 = vmatpush1.msra.mxu0 %v346
        %383 = vmatprep.subr.mxu0 0.0
        %384 = vmatpush2.msra.mxu0 0.0
        %385 = vmatprep.subr.mxu0 0.0
        %386 = vmatpush2.msra.mxu0 0.0
        %387 = vmatprep.subr.mxu0 0.0
        %388 = vmatpush2.msra.mxu0 0.0
        %389 = vmatprep.subr.mxu0 0.0
        %390 = vmatpush2.msra.mxu0 0.0
        %391 = vmatprep.subr.mxu0 0.0
        %392 = vmatpush2.msra.mxu0 0.0
        %393 = vmatprep.subr.mxu0 0.0
        %394 = vmatpush2.msra.mxu0 0.0
        %395 = vmatprep.subr.mxu0 0.0
        %396 = vmatpush2.msra.mxu0 0.0
        %397 = vmatprep.subr.mxu0 0.0
        %398 = vmatpush2.msra.mxu0 0.0
        %399 = vmatprep.subr.mxu0 0.0
        %400 = vmatpush2.msra.mxu0 0.0
        %401 = vmatprep.subr.mxu0 0.0
        %402 = vmatpush2.msra.mxu0 0.0
        %403 = vmatprep.subr.mxu0 0.0
        %404 = vmatpush2.msra.mxu0 0.0
        %405 = vmatprep.subr.mxu0 0.0
        %406 = vmatpush2.msra.mxu0 0.0
        %407 = vmatprep.subr.mxu0 0.0
        %408 = vmatpush2.msra.mxu0 0.0
        %409 = vmatprep.subr.mxu0 0.0
        %410 = vmatpush2.msra.mxu0 0.0
        %411 = vmatprep.subr.mxu0 0.0
        %412 = vmatpush2.msra.mxu0 0.0
        %413 = vmatprep.subr.mxu0 0.0
        %414 = vmatpush2.msra.mxu0 0.0
        %415 = vmatprep.mubr.f32.mxu0 0.0
        %416 = vmatmul.mubr.f32.gmra.mxu0 %v349
        %v417 = vpop.f32.mrf.mxu0
        %v418 = vadd.f32 0.0, %v417
        %v419 = vpop.f32.mrf.mxu0
        %420 = vdwg.mxu0
        %v421 = vsub.f32 0.0, %v418
        %v422 = vmul.f32 %v421, 1.442695
        %v423 = vpow.pop %v422
        %v424 = vadd.f32 %v423, 1.0
        %v425 = vrcp.pop %v424
        %v426 = vmul.f32 1.0, %v425
        %v427 = vlaneseq
        %v428 = vshrl.u32 %v427, 7
        %v429 = vsub.s32 0, %v428
        %v430 = vrot.slane %v426, %v429
        %v431 = vmul.f32 %v189, %v430
        %v432 = vmul.f32 %v190, %v430
        %v433 = vmul.f32 %v191, %v430
        %v434 = vmul.f32 %v192, %v430
        %v435 = vmul.f32 %v193, %v430
        %v436 = vmul.f32 %v194, %v430
        %v437 = vmul.f32 %v195, %v430
        %v438 = vmul.f32 %v196, %v430
        %v439 = vmul.f32 %v197, %v430
        %v440 = vmul.f32 %v198, %v430
        %v441 = vmul.f32 %v199, %v430
        %v442 = vmul.f32 %v200, %v430
        %v443 = vmul.f32 %v201, %v430
        %v444 = vmul.f32 %v202, %v430
        %v445 = vmul.f32 %v203, %v430
        %v446 = vmul.f32 %v204, %v430
        %v447 = vmul.f32 %v205, %v430
        %v448 = vmul.f32 %v206, %v430
        %v449 = vmul.f32 %v207, %v430
        %v450 = vmul.f32 %v208, %v430
        %v451 = vmul.f32 %v209, %v430
        %v452 = vmul.f32 %v210, %v430
        %v453 = vmul.f32 %v211, %v430
        %v454 = vmul.f32 %v212, %v430
        %v455 = vmul.f32 %v213, %v430
        %v456 = vmul.f32 %v214, %v430
        %v457 = vmul.f32 %v215, %v430
        %v458 = vmul.f32 %v216, %v430
        %v459 = vmul.f32 %v217, %v430
        %v460 = vmul.f32 %v218, %v430
        %v461 = vmul.f32 %v219, %v430
        %v462 = vmul.f32 %v220, %v430
        %463 = vst [vmem:[%s188] sm:$0xff] %v431
        %464 = vst [vmem:[%s188 + $0x8] sm:$0xff] %v432
        %465 = vst [vmem:[%s188 + $0x10] sm:$0xff] %v433
        %466 = vst [vmem:[%s188 + $0x18] sm:$0xff] %v434
        %467 = vst [vmem:[%s188 + $0x20] sm:$0xff] %v435
        %468 = vst [vmem:[%s188 + $0x28] sm:$0xff] %v436
        %469 = vst [vmem:[%s188 + $0x30] sm:$0xff] %v437
        %470 = vst [vmem:[%s188 + $0x38] sm:$0xff] %v438
        %471 = vst [vmem:[%s188 + $0x40] sm:$0xff] %v439
        %472 = vst [vmem:[%s188 + $0x48] sm:$0xff] %v440
        %473 = vst [vmem:[%s188 + $0x50] sm:$0xff] %v441
        %474 = vst [vmem:[%s188 + $0x58] sm:$0xff] %v442
        %475 = vst [vmem:[%s188 + $0x60] sm:$0xff] %v443
        %476 = vst [vmem:[%s188 + $0x68] sm:$0xff] %v444
        %477 = vst [vmem:[%s188 + $0x70] sm:$0xff] %v445
        %478 = vst [vmem:[%s188 + $0x78] sm:$0xff] %v446
        %479 = vst [vmem:[%s188 + $0x80] sm:$0xff] %v447
        %480 = vst [vmem:[%s188 + $0x88] sm:$0xff] %v448
        %481 = vst [vmem:[%s188 + $0x90] sm:$0xff] %v449
        %482 = vst [vmem:[%s188 + $0x98] sm:$0xff] %v450
        %483 = vst [vmem:[%s188 + $0xa0] sm:$0xff] %v451
        %484 = vst [vmem:[%s188 + $0xa8] sm:$0xff] %v452
        %485 = vst [vmem:[%s188 + $0xb0] sm:$0xff] %v453
        %486 = vst [vmem:[%s188 + $0xb8] sm:$0xff] %v454
        %487 = vst [vmem:[%s188 + $0xc0] sm:$0xff] %v455
        %488 = vst [vmem:[%s188 + $0xc8] sm:$0xff] %v456
        %489 = vst [vmem:[%s188 + $0xd0] sm:$0xff] %v457
        %490 = vst [vmem:[%s188 + $0xd8] sm:$0xff] %v458
        %491 = vst [vmem:[%s188 + $0xe0] sm:$0xff] %v459
        %492 = vst [vmem:[%s188 + $0xe8] sm:$0xff] %v460
        %493 = vst [vmem:[%s188 + $0xf0] sm:$0xff] %v461
        %494 = vst [vmem:[%s188 + $0xf8] sm:$0xff] %v462
        %s495 = sand.u32 %s96, 1
        %s496 = scalar_lea.sflag [#allocation4], %s495
        %s497 = sand.u32 %s96, 1
        %s498 = smul.addr %s497, 256
        %s499 = scalar_lea.vmem [#allocation5], %s498
        // Predicated region
        $region37: #{tpu_custom_call.1} parent=31 // pred_check
          %p500 = pneg %p106
        $region38: #{tpu_custom_call.1} parent=31 // pred_check_branch
          %502 = sbr.rel (%p500) target = $region40
        $region39: #{tpu_custom_call.1} parent=31 // pred_region
          %s504 = ssub.s32 4096, 4096
          %505 = vsyncadd %s496, %s504
          %s506 = smul.addr %s20, 32
          %s507 = smul.addr %s506, 128
          %s508 = scalar_lea.hbm %s3, %s507
          %s509 = sshll.u32 %s499, 4
          %s510 = int_to_ptr.vmem [resolvable:$true] %s509
          %515 = dma.vmem_to_hbm [thread:$0]  %s510, 4096, %s508, %s496, 128, 128, 8
        $region40: #{tpu_custom_call.1} parent=31 // pred_fallthru
          _
      $region32: #{tpu_custom_call.1} parent=5 // pred_fallthru
        _
      %p516 = scmp.le.s32.totalorder 2, %s15
      // Predicated region
      $region41: #{tpu_custom_call.1} parent=5 // pred_check
        %p517 = pneg %p516
      $region42: #{tpu_custom_call.1} parent=5 // pred_check_branch
        %519 = sbr.rel (%p517) target = $region44
      $region43: #{tpu_custom_call.1} parent=5 // pred_region
        %s520 = ssub.s32 %s15, 2
        // Predicated region
        $region45: #{tpu_custom_call.1} parent=43 // pred_check
          %p521 = pneg %p112
        $region46: #{tpu_custom_call.1} parent=43 // pred_check_branch
          %523 = sbr.rel (%p521) target = $region48
        $region47: #{tpu_custom_call.1} parent=43 // pred_region
          %s524 = sand.u32 %s97, 1
          %s525 = scalar_lea.sflag [#allocation4], %s524
          %s526 = sand.u32 %s97, 1
          %s527 = smul.addr %s526, 256
          %s528 = scalar_lea.vmem [#allocation5], %s527
          %529 = dma.done %s525, 4096
        $region48: #{tpu_custom_call.1} parent=43 // pred_fallthru
          _
      $region44: #{tpu_custom_call.1} parent=5 // pred_fallthru
        _
    $region6: #{tpu_custom_call.1} parent=1 // loop_footer
      %s19 = sadd.s32 1, %s15
    $region7: #{tpu_custom_call.1} parent=1 // loop_footer_branch
      %14 = sbr.rel target = $region3
    $region8: #{tpu_custom_call.1} parent=1 // loop_exit
      _
    %530 = vsyncpa [#allocation3], 1
    %s531 = scalar_lea.sflag [#allocation3], 1
    %532 = vsyncpa %s531, 1
    %533 = vsyncpa [#allocation4], 1
    %s534 = scalar_lea.sflag [#allocation4], 1
    %535 = vsyncpa %s534, 1

</llo_original>
